<compile_context>
chip_gen: v5e
topology: v5e:2x2
jax: 0.10.0
libtpu: 0.0.40
codegen_flags: <defaults>
</compile_context>

<pallas_src>
import functools

import jax
import jax.numpy as jnp
from jax.experimental import pallas as pl
from jax.experimental.pallas import tpu as pltpu


def _focal_loss_kernel(x_ref, t_ref, o_ref, *, gamma, alpha, hw_total, masked):
    i = pl.program_id(2)

    @pl.when(i == 0)
    def _():
        o_ref[...] = jnp.zeros_like(o_ref)

    x = x_ref[0].astype(jnp.float32)        # (C, S, 128) logits, lane-dense
    t_idx = t_ref[0]                        # (1, S, 128) int32 class ids
    C, S, L = x.shape

    # One-hot as a boolean mask only (no float one-hot, no multiplies by t).
    cls = jax.lax.broadcasted_iota(jnp.int32, (C, S, L), 0)
    m = cls == t_idx                        # broadcast over C

    # Shared transcendentals: e = exp(-|x|) serves sigmoid AND softplus.
    ax = jnp.abs(x)
    e = jnp.exp(-ax)                        # EUP exp (once)
    inv = pl.reciprocal(1.0 + e, approx=True)   # EUP reciprocal (feeds focal
    p = jnp.where(x >= 0.0, inv, e * inv)       # weight only; bce is exact)
    softplus = jnp.log1p(e)                 # log(1 + exp(-|x|))

    # Boolean selects instead of arithmetic one-hot blending.
    pt = jnp.where(m, 1.0 - p, p)

    # pt ** gamma without exp/log for small integer gamma (default gamma=2).
    if float(gamma).is_integer() and 0 <= gamma <= 8:
        g = int(gamma)
        pt_pow = jnp.ones_like(pt) if g == 0 else pt
        for _ in range(max(g - 1, 0)):
            pt_pow = pt_pow * pt
    else:
        pt_pow = jnp.power(pt, gamma)

    focal_w = jnp.where(m, alpha, 1.0 - alpha) * pt_pow

    # Stable BCE-with-logits via select: t=1 -> max(-x,0)+softplus,
    # t=0 -> max(x,0)+softplus  (drops the -x*t multiply).
    bce = jnp.where(m, jnp.maximum(-x, 0.0), jnp.maximum(x, 0.0)) + softplus

    loss = focal_w * bce

    if masked:
        # Only emitted when the wrapper padded HW; true select keeps padded
        # positions out of the accumulator.
        blk = pl.program_id(1) * pl.num_programs(2) + i
        s_io = jax.lax.broadcasted_iota(jnp.int32, (1, S, L), 1)
        l_io = jax.lax.broadcasted_iota(jnp.int32, (1, S, L), 2)
        pos = (blk * S + s_io) * L + l_io
        loss = jnp.where(pos < hw_total, loss, 0.0)

    # Reduce over C (leading non-tiled dim -> pure VPU adds), then fold the
    # sublane rows into the small (8, 128) resident output accumulator with
    # static-sliced adds (no XLU reduce, no full-tile scratch).
    cs = jnp.sum(loss, axis=0)              # (S, 128)
    s_full = (S // 8) * 8
    for s0 in range(0, s_full, 8):
        o_ref[0, 0] += cs[s0:s0 + 8, :]
    rem = S - s_full
    if rem:
        o_ref[0, 0, 0:rem, :] += cs[s_full:, :]


def focal_loss(inputs, targets, *, gamma=2.0, alpha=0.25, loss_weight=1.0):
    """inputs: (N, C, H, W) float logits; targets: (N, H, W) int class ids.

    Returns the scalar 'mean'-reduced sigmoid focal loss times loss_weight,
    matching FocalLoss.forward with weight=None, reduction='mean'.
    """
    # TODO(synk): per-sample `weight` vector and reduction='sum'/'none' paths
    # of weight_reduce_loss are not implemented (module defaults used).
    N, C, H, W = inputs.shape
    HW = H * W
    LANE = 128

    in_bytes = jnp.dtype(inputs.dtype).itemsize

    # ---- VMEM-aware tile sizing ------------------------------------------
    # Per sublane-row (128 positions): double-buffered logits + targets
    # blocks, plus headroom for the ~8 in-flight f32 elementwise temporaries.
    bytes_per_row = LANE * (2 * C * in_bytes + 2 * 4 + 8 * C * 4)
    block_budget = 24 << 20
    max_sub = max(8, min(512, (block_budget // bytes_per_row) // 8 * 8))

    s_raw = pl.cdiv(HW, LANE)
    if s_raw <= max_sub:
        hw_sub, n_hw = s_raw, 1             # one step per image, no 8-div need
    else:
        hw_sub = max_sub                    # multiple of 8
        n_hw = pl.cdiv(s_raw, hw_sub)
    s_pad = hw_sub * n_hw
    hw_pad = s_pad * LANE
    pad = hw_pad - HW

    # Free metadata reshapes -- no transpose; padding (one HBM copy) only on
    # ragged shapes, masked in-kernel.
    x = inputs.reshape(N, C, HW)
    t = targets.reshape(N, 1, HW).astype(jnp.int32)
    if pad:
        x = jnp.pad(x, ((0, 0), (0, 0), (0, pad)))
        t = jnp.pad(t, ((0, 0), (0, 0), (0, pad)))
    x4 = x.reshape(N, C, s_pad, LANE)
    t4 = t.reshape(N, 1, s_pad, LANE)

    # Guarantee a >=2-extent parallel axis when N is odd (v7x has 2 TCs).
    n_outer = 2 if (N % 2 == 1 and n_hw % 2 == 0) else 1
    n_inner = n_hw // n_outer
    grid = (N, n_outer, n_inner)

    kernel = functools.partial(
        _focal_loss_kernel, gamma=float(gamma), alpha=float(alpha),
        hw_total=HW, masked=bool(pad))

    out = pl.pallas_call(
        kernel,
        out_shape=jax.ShapeDtypeStruct((N, n_outer, 8, LANE), jnp.float32),
        grid_spec=pltpu.PrefetchScalarGridSpec(
            num_scalar_prefetch=0,
            grid=grid,
            in_specs=[
                pl.BlockSpec((1, C, hw_sub, LANE),
                             lambda n, o, i: (n, 0, o * n_inner + i, 0)),
                pl.BlockSpec((1, 1, hw_sub, LANE),
                             lambda n, o, i: (n, 0, o * n_inner + i, 0)),
            ],
            out_specs=pl.BlockSpec((1, 1, 8, LANE),
                                   lambda n, o, i: (n, o, 0, 0)),
        ),
        compiler_params=pltpu.CompilerParams(
            dimension_semantics=("parallel", "parallel", "arbitrary"),
            vmem_limit_bytes=48 * 1024 * 1024),
    )(x4, t4)

    total = jnp.sum(out)                          # partials -> scalar
    mean = total / jnp.float32(N * C * H * W)     # reduction='mean'
    return jnp.float32(loss_weight) * mean


def _reference(inputs, targets, gamma=2.0, alpha=0.25, loss_weight=1.0):
    x = inputs.astype(jnp.float32)
    C = x.shape[1]
    t = jax.nn.one_hot(targets, C, dtype=jnp.float32)        # (N,H,W,C)
    t = jnp.transpose(t, (0, 3, 1, 2))                        # (N,C,H,W)
    p = jax.nn.sigmoid(x)
    pt = (1 - p) * t + p * (1 - t)
    fw = (alpha * t + (1 - alpha) * (1 - t)) * pt ** gamma
    bce = jnp.maximum(x, 0) - x * t + jnp.log1p(jnp.exp(-jnp.abs(x)))
    return loss_weight * jnp.mean(fw * bce)


if __name__ == "__main__":
    key = jax.random.PRNGKey(0)
    k1, k2 = jax.random.split(key)

    N, C, H, W = 2, 4, 16, 16
    logits = jax.random.normal(k1, (N, C, H, W), dtype=jnp.float32)
    targets = jax.random.randint(k2, (N, H, W), 0, C, dtype=jnp.int32)

    out = focal_loss(logits, targets, gamma=2.0, alpha=0.25, loss_weight=1.0)
    out = jax.block_until_ready(out)

    ref = _reference(logits, targets)
    # rtol accounts for the approx (EUP) reciprocal inside sigmoid (it only
    # feeds the focal modulation weight; the BCE term is exact).
    assert jnp.allclose(out, ref, rtol=1e-3, atol=1e-6), (out, ref)

    print("KERNEL_OK")
</pallas_src>

<mosaic_0001>
module attributes {stable_mosaic.version = 11 : i64} {
  func.func @_focal_loss_kernel(%arg0: i32, %arg1: i32, %arg2: i32, %arg3: memref<1x4x2x128xf32, #tpu.memory_space<vmem>>, %arg4: memref<1x1x2x128xi32, #tpu.memory_space<vmem>>, %arg5: memref<1x1x8x128xf32, #tpu.memory_space<vmem>>) attributes {dimension_semantics = [#tpu.dimension_semantics<parallel>, #tpu.dimension_semantics<parallel>, #tpu.dimension_semantics<arbitrary>], iteration_bounds = array<i64: 2, 1, 1>, scalar_prefetch = 0 : i64, scratch_operands = 0 : i64, tpu.core_type = #tpu.core_type<tc>, window_params = [{transform_indices = @transform_0, window_bounds = array<i64: 1, 4, 2, 128>}, {transform_indices = @transform_1, window_bounds = array<i64: 1, 1, 2, 128>}, {transform_indices = @transform_2, window_bounds = array<i64: 1, 1, 8, 128>}]} {
    %c0_i32 = arith.constant 0 : i32
    %0 = arith.cmpi eq, %arg2, %c0_i32 : i32
    %1 = arith.extui %0 : i1 to i32
    %c0_i32_0 = arith.constant 0 : i32
    %2 = arith.cmpi ne, %1, %c0_i32_0 : i32
    scf.if %2 {
      %cst_25 = arith.constant 0.000000e+00 : f32
      %46 = vector.broadcast %cst_25 : f32 to vector<1x1x8x128xf32>
      %c0_26 = arith.constant 0 : index
      %c0_27 = arith.constant 0 : index
      %c0_28 = arith.constant 0 : index
      %c0_29 = arith.constant 0 : index
      %47 = vector.load %arg5[%c0_26, %c0_27, %c0_28, %c0_29] : memref<1x1x8x128xf32, #tpu.memory_space<vmem>>, vector<1x1x8x128xf32>
      tpu.vector_store %arg5[%c0_26, %c0_27, %c0_28, %c0_29], %46 {strides = array<i32>} : memref<1x1x8x128xf32, #tpu.memory_space<vmem>>, vector<1x1x8x128xf32>,
    } else {
    }
    %c0 = arith.constant 0 : index
    %c0_1 = arith.constant 0 : index
    %c0_2 = arith.constant 0 : index
    %c0_3 = arith.constant 0 : index
    %3 = vector.load %arg3[%c0, %c0_1, %c0_2, %c0_3] : memref<1x4x2x128xf32, #tpu.memory_space<vmem>>, vector<1x4x2x128xf32>
    %4 = vector.shape_cast %3 : vector<1x4x2x128xf32> to vector<4x2x128xf32>
    %c0_4 = arith.constant 0 : index
    %c0_5 = arith.constant 0 : index
    %c0_6 = arith.constant 0 : index
    %c0_7 = arith.constant 0 : index
    %5 = vector.load %arg4[%c0_4, %c0_5, %c0_6, %c0_7] : memref<1x1x2x128xi32, #tpu.memory_space<vmem>>, vector<1x1x2x128xi32>
    %6 = vector.shape_cast %5 : vector<1x1x2x128xi32> to vector<1x2x128xi32>
    %7 = tpu.iota {dimensions = array<i32: 0>} : vector<4x2x128xi32>
    %8 = vector.broadcast %6 : vector<1x2x128xi32> to vector<4x2x128xi32>
    %9 = arith.cmpi eq, %7, %8 : vector<4x2x128xi32>
    %10 = math.absf %4 : vector<4x2x128xf32>
    %cst = arith.constant 0.000000e+00 : f32
    %11 = vector.broadcast %cst : f32 to vector<4x2x128xf32>
    %12 = arith.subf %11, %10 : vector<4x2x128xf32>
    %13 = math.exp %12 : vector<4x2x128xf32>
    %cst_8 = arith.constant 1.000000e+00 : f32
    %14 = vector.broadcast %cst_8 : f32 to vector<4x2x128xf32>
    %15 = arith.addf %14, %13 : vector<4x2x128xf32>
    %16 = tpu.reciprocal %15 {approx = true} : vector<4x2x128xf32> -> vector<4x2x128xf32>
    %cst_9 = arith.constant 0.000000e+00 : f32
    %17 = vector.broadcast %cst_9 : f32 to vector<4x2x128xf32>
    %18 = arith.cmpf oge, %4, %17 : vector<4x2x128xf32>
    %19 = arith.mulf %13, %16 : vector<4x2x128xf32>
    %20 = arith.select %18, %16, %19 : vector<4x2x128xi1>, vector<4x2x128xf32>
    %21 = math.log1p %13 : vector<4x2x128xf32>
    %cst_10 = arith.constant 1.000000e+00 : f32
    %22 = vector.broadcast %cst_10 : f32 to vector<4x2x128xf32>
    %23 = arith.subf %22, %20 : vector<4x2x128xf32>
    %24 = arith.select %9, %23, %20 : vector<4x2x128xi1>, vector<4x2x128xf32>
    %25 = arith.mulf %24, %24 : vector<4x2x128xf32>
    %cst_11 = arith.constant 2.500000e-01 : f32
    %cst_12 = arith.constant 7.500000e-01 : f32
    %26 = vector.broadcast %cst_11 : f32 to vector<4x2x128xf32>
    %27 = vector.broadcast %cst_12 : f32 to vector<4x2x128xf32>
    %28 = arith.select %9, %26, %27 : vector<4x2x128xi1>, vector<4x2x128xf32>
    %29 = arith.mulf %28, %25 : vector<4x2x128xf32>
    %cst_13 = arith.constant 0.000000e+00 : f32
    %30 = vector.broadcast %cst_13 : f32 to vector<4x2x128xf32>
    %31 = arith.subf %30, %4 : vector<4x2x128xf32>
    %cst_14 = arith.constant 0.000000e+00 : f32
    %32 = vector.broadcast %cst_14 : f32 to vector<4x2x128xf32>
    %33 = arith.maximumf %31, %32 : vector<4x2x128xf32>
    %cst_15 = arith.constant 0.000000e+00 : f32
    %34 = vector.broadcast %cst_15 : f32 to vector<4x2x128xf32>
    %35 = arith.maximumf %4, %34 : vector<4x2x128xf32>
    %36 = arith.select %9, %33, %35 : vector<4x2x128xi1>, vector<4x2x128xf32>
    %37 = arith.addf %36, %21 : vector<4x2x128xf32>
    %38 = arith.mulf %29, %37 : vector<4x2x128xf32>
    %cst_16 = arith.constant dense<0.000000e+00> : vector<2x128xf32>
    %39 = vector.multi_reduction <add>, %38, %cst_16 [0] : vector<4x2x128xf32> to vector<2x128xf32>
    %c0_17 = arith.constant 0 : index
    %c0_18 = arith.constant 0 : index
    %c0_19 = arith.constant 0 : index
    %c0_20 = arith.constant 0 : index
    %40 = vector.load %arg5[%c0_17, %c0_18, %c0_19, %c0_20] : memref<1x1x8x128xf32, #tpu.memory_space<vmem>>, vector<1x1x2x128xf32>
    %41 = vector.shape_cast %40 : vector<1x1x2x128xf32> to vector<2x128xf32>
    %42 = arith.addf %41, %39 : vector<2x128xf32>
    %c0_21 = arith.constant 0 : index
    %c0_22 = arith.constant 0 : index
    %c0_23 = arith.constant 0 : index
    %c0_24 = arith.constant 0 : index
    %43 = vector.load %arg5[%c0_21, %c0_22, %c0_23, %c0_24] : memref<1x1x8x128xf32, #tpu.memory_space<vmem>>, vector<1x1x2x128xf32>
    %44 = vector.shape_cast %43 : vector<1x1x2x128xf32> to vector<2x128xf32>
    %45 = vector.shape_cast %42 : vector<2x128xf32> to vector<1x1x2x128xf32>
    tpu.vector_store %arg5[%c0_21, %c0_22, %c0_23, %c0_24], %45 {strides = array<i32>} : memref<1x1x8x128xf32, #tpu.memory_space<vmem>>, vector<1x1x2x128xf32>,
    return
  }
  func.func @transform_0(%arg0: i32, %arg1: i32, %arg2: i32) -> (i32, i32, i32, i32) {
    %c1_i32 = arith.constant 1 : i32
    %0 = arith.muli %arg1, %c1_i32 : i32
    %1 = arith.addi %0, %arg2 : i32
    %c0_i32 = arith.constant 0 : i32
    %c0_i32_0 = arith.constant 0 : i32
    %c0_i32_1 = arith.constant 0 : i32
    return %arg0, %c0_i32, %1, %c0_i32_0 : i32, i32, i32, i32
  }
  func.func @transform_1(%arg0: i32, %arg1: i32, %arg2: i32) -> (i32, i32, i32, i32) {
    %c1_i32 = arith.constant 1 : i32
    %0 = arith.muli %arg1, %c1_i32 : i32
    %1 = arith.addi %0, %arg2 : i32
    %c0_i32 = arith.constant 0 : i32
    %c0_i32_0 = arith.constant 0 : i32
    %c0_i32_1 = arith.constant 0 : i32
    return %arg0, %c0_i32, %1, %c0_i32_0 : i32, i32, i32, i32
  }
  func.func @transform_2(%arg0: i32, %arg1: i32, %arg2: i32) -> (i32, i32, i32, i32) {
    %c0_i32 = arith.constant 0 : i32
    %c0_i32_0 = arith.constant 0 : i32
    %c0_i32_1 = arith.constant 0 : i32
    return %arg0, %arg1, %c0_i32, %c0_i32_0 : i32, i32, i32, i32
  }
}

</mosaic_0001>

<llo_original>
// kernel: tpu_custom_call.1
$region0: #{tpu_custom_call.1}
  #allocation0 [shape = 'u32[]', space=smem, size = 0x4, offset = 0x4, fixed_abs, tag = 'smem constant byte address 0x4 - core index']
  #allocation1 [shape = 'u32[72,128]{1,0:T(1,128)}', space=vmem, size = 0x9000, scoped, tag = 'internal scratch']
  %s0 = inlined_call_operand.hbm [shape: f32[2,4,2,128], index: 0, kind: input, shape index: {}]
  %s1 = inlined_call_operand.hbm [shape: s32[2,1,2,128], index: 1, kind: input, shape index: {}]
  %s2 = inlined_call_operand.hbm [shape: f32[2,1,8,128], index: 2, kind: output, shape index: {}]
  %s3 = sld [smem:[#allocation0]]
  $region53: #{tpu_custom_call.1} parent=0
    _
  %s5 = ssub.s32 1, %s3
  %s6 = scalar_select 0, %s5, %s3
  $region1: #{tpu_custom_call.1} parent=0
    #allocation2 [shape = 'u8[8192]{0}', space=vmem, size = 0x2000, scoped, tag = 'input window, operand 0']
    #allocation3 [shape = 's32[2]{0}', space=sflag, size = 0x8, scoped, tag = 'scoped memory for tpu_custom_call.1']
    #allocation4 [shape = 's32[2]{0}', space=sflag, size = 0x8, scoped, tag = 'scoped memory for tpu_custom_call.1']
    #allocation5 [shape = 'u8[2048]{0}', space=vmem, size = 0x800, scoped, tag = 'input window, operand 1']
    #allocation6 [shape = 's32[2]{0}', space=sflag, size = 0x8, scoped, tag = 'scoped memory for tpu_custom_call.1']
    #allocation7 [shape = 'u8[8192]{0}', space=vmem, size = 0x2000, scoped, tag = 'output window, operand 0']
    %7 = vsyncpa [#allocation3], 0
    %s8 = scalar_lea.sflag [#allocation3], 1
    %9 = vsyncpa %s8, 0
    %10 = vsyncpa [#allocation6], 0
    %s11 = scalar_lea.sflag [#allocation6], 1
    %12 = vsyncpa %s11, 0
    %13 = vsyncpa [#allocation4], 0
    %s14 = scalar_lea.sflag [#allocation4], 1
    %15 = vsyncpa %s14, 0
    loop: start=0, step=1, limit=4
    $region2: #{tpu_custom_call.1} parent=1 // loop_pre_header
      _
    $region3: #{tpu_custom_call.1} parent=1 // loop_header
      %s17 = sphi 0, %s21
      %p18 = scmp.ge.s32.totalorder %s17, 4
      %s24 = sphi 0, %s43
      %s25 = sphi 0, %s39
      %s26 = sphi 0, %s35
      %s27 = sphi 0, %s24
      %s28 = sphi 0, %s25
      %s29 = sphi 0, %s26
      %s30 = sphi 0, %s27
      %s31 = sphi 0, %s28
      %s32 = sphi 0, %s29
      %s50 = sphi 0, %s52
      %s53 = sphi 0, %s50
      %s54 = sphi 0, %s53
      %s70 = sphi 0, %s54
      %s80 = sphi 0, %s82
      %s83 = sphi 0, %s80
      %s84 = sphi 0, %s83
      %s100 = sphi 0, %s84
      %s108 = sphi 0, %s110
      %s111 = sphi 0, %s108
      %s112 = sphi 0, %s111
      %s128 = sphi 0, %s112
    $region4: #{tpu_custom_call.1} parent=1 // loop_header_branch
      %20 = sbr.rel (%p18) target = $region8
    $region5: #{tpu_custom_call.1} parent=1 // loop_body
      %s22 = ssub.s32 %s17, 1
      %s23 = ssub.s32 %s17, 2
      %s33 = sadd.s32 1, %s26
      %p34 = scmp.ge.s32.totalorder %s33, 1
      %s35 = scalar_select %p34, 0, %s33
      %s36 = sadd.s32 1, %s25
      %s37 = scalar_select %p34, %s36, %s25
      %p38 = scmp.ge.s32.totalorder %s37, 1
      %s39 = scalar_select %p38, 0, %s37
      %s40 = sadd.s32 1, %s24
      %s41 = scalar_select %p38, %s40, %s24
      %p42 = scmp.ge.s32.totalorder %s41, 2
      %s43 = scalar_select %p42, 0, %s41
      %s44 = sadd.s32 %s25, %s26
      %s45 = sadd.s32 %s39, %s35
      %s46 = ssub.s32 %s24, %s43
      %s47 = ssub.s32 %s44, %s45
      %s48 = sor.u32 %s46, %s47
      %p49 = scmp.eq.s32.totalorder %s48, 0
      %s51 = sadd.s32 %s50, 1
      %s52 = scalar_select %p49, %s50, %s51
      %p55 = pneg %p49
      %p56 = scmp.eq.s32.totalorder %s17, 1
      %p57 = por %p55, %p56
      %p58 = scmp.ne.s32.totalorder %s50, %s53
      %p59 = scmp.eq.s32.totalorder %s17, 0
      %p60 = por %p58, %p59
      %p61 = scmp.ne.s32.totalorder %s50, %s53
      %p62 = scmp.eq.s32.totalorder %s22, 1
      %p63 = por %p61, %p62
      %p64 = scmp.ne.s32.totalorder %s53, %s54
      %p65 = scmp.eq.s32.totalorder %s22, 0
      %p66 = por %p64, %p65
      %p67 = scmp.ne.s32.totalorder %s53, %s54
      %p68 = scmp.eq.s32.totalorder %s23, 1
      %p69 = por %p67, %p68
      %p71 = scmp.ne.s32.totalorder %s54, %s70
      %p72 = scmp.eq.s32.totalorder %s23, 0
      %p73 = por %p71, %p72
      %s74 = sadd.s32 %s25, %s26
      %s75 = sadd.s32 %s39, %s35
      %s76 = ssub.s32 %s24, %s43
      %s77 = ssub.s32 %s74, %s75
      %s78 = sor.u32 %s76, %s77
      %p79 = scmp.eq.s32.totalorder %s78, 0
      %s81 = sadd.s32 %s80, 1
      %s82 = scalar_select %p79, %s80, %s81
      %p85 = pneg %p79
      %p86 = scmp.eq.s32.totalorder %s17, 1
      %p87 = por %p85, %p86
      %p88 = scmp.ne.s32.totalorder %s80, %s83
      %p89 = scmp.eq.s32.totalorder %s17, 0
      %p90 = por %p88, %p89
      %p91 = scmp.ne.s32.totalorder %s80, %s83
      %p92 = scmp.eq.s32.totalorder %s22, 1
      %p93 = por %p91, %p92
      %p94 = scmp.ne.s32.totalorder %s83, %s84
      %p95 = scmp.eq.s32.totalorder %s22, 0
      %p96 = por %p94, %p95
      %p97 = scmp.ne.s32.totalorder %s83, %s84
      %p98 = scmp.eq.s32.totalorder %s23, 1
      %p99 = por %p97, %p98
      %p101 = scmp.ne.s32.totalorder %s84, %s100
      %p102 = scmp.eq.s32.totalorder %s23, 0
      %p103 = por %p101, %p102
      %s104 = ssub.s32 %s24, %s43
      %s105 = ssub.s32 %s25, %s39
      %s106 = sor.u32 %s104, %s105
      %p107 = scmp.eq.s32.totalorder %s106, 0
      %s109 = sadd.s32 %s108, 1
      %s110 = scalar_select %p107, %s108, %s109
      %p113 = pneg %p107
      %p114 = scmp.eq.s32.totalorder %s17, 1
      %p115 = por %p113, %p114
      %p116 = scmp.ne.s32.totalorder %s108, %s111
      %p117 = scmp.eq.s32.totalorder %s17, 0
      %p118 = por %p116, %p117
      %p119 = scmp.ne.s32.totalorder %s108, %s111
      %p120 = scmp.eq.s32.totalorder %s22, 1
      %p121 = por %p119, %p120
      %p122 = scmp.ne.s32.totalorder %s111, %s112
      %p123 = scmp.eq.s32.totalorder %s22, 0
      %p124 = por %p122, %p123
      %p125 = scmp.ne.s32.totalorder %s111, %s112
      %p126 = scmp.eq.s32.totalorder %s23, 1
      %p127 = por %p125, %p126
      %p129 = scmp.ne.s32.totalorder %s112, %s128
      %p130 = scmp.eq.s32.totalorder %s23, 0
      %p131 = por %p129, %p130
      %p132 = scmp.le.s32.totalorder 1, %s17
      %p133 = scmp.lt.s32.totalorder %s17, 3
      %p134 = pnand %p132, %p133
      %p135 = pneg %p134
      // Predicated region
      $region9: #{tpu_custom_call.1} parent=5 // pred_check
        _
      $region10: #{tpu_custom_call.1} parent=5 // pred_check_branch
        %137 = sbr.rel (%p134) target = $region12
      $region11: #{tpu_custom_call.1} parent=5 // pred_region
        %s138 = ssub.s32 %s17, 1
      $region12: #{tpu_custom_call.1} parent=5 // pred_fallthru
        _
      %p139 = scmp.lt.s32.totalorder %s17, 2
      // Predicated region
      $region13: #{tpu_custom_call.1} parent=5 // pred_check
        %p140 = pneg %p139
      $region14: #{tpu_custom_call.1} parent=5 // pred_check_branch
        %142 = sbr.rel (%p140) target = $region16
      $region15: #{tpu_custom_call.1} parent=5 // pred_region
        // Predicated region
        $region17: #{tpu_custom_call.1} parent=15 // pred_check
          %p143 = pneg %p60
        $region18: #{tpu_custom_call.1} parent=15 // pred_check_branch
          %145 = sbr.rel (%p143) target = $region20
        $region19: #{tpu_custom_call.1} parent=15 // pred_region
          %s146 = sand.u32 %s50, 1
          %s147 = scalar_lea.sflag [#allocation3], %s146
          %s148 = sand.u32 %s50, 1
          %s149 = smul.addr %s148, 8
          %s150 = scalar_lea.vmem [#allocation2], %s149
          %s151 = sadd.s32 %s25, %s26
          %153 = vsyncadd %s147, 0
          %s154 = smul.addr %s24, 4
          %s155 = sadd.s32 %s151, %s154
          %s156 = smul.addr %s155, 2
          %s157 = scalar_lea.hbm %s0, %s156
          %s158 = sshll.u32 %s157, 4
          %s159 = int_to_ptr.hbm [resolvable:$true] %s158
          %s160 = sshll.u32 %s150, 4
          %s161 = int_to_ptr.vmem [resolvable:$true] %s160
          %166 = dma.hbm_to_vmem [thread:$0]  %s159, 128, %s161, %s147, 32, 32, 2
        $region20: #{tpu_custom_call.1} parent=15 // pred_fallthru
          _
        // Predicated region
        $region21: #{tpu_custom_call.1} parent=15 // pred_check
          %p167 = pneg %p90
        $region22: #{tpu_custom_call.1} parent=15 // pred_check_branch
          %169 = sbr.rel (%p167) target = $region24
        $region23: #{tpu_custom_call.1} parent=15 // pred_region
          %s170 = sand.u32 %s80, 1
          %s171 = scalar_lea.sflag [#allocation6], %s170
          %s172 = sand.u32 %s80, 1
          %s173 = smul.addr %s172, 2
          %s174 = scalar_lea.vmem [#allocation5], %s173
          %s175 = sadd.s32 %s25, %s26
          %177 = vsyncadd %s171, 0
          %s178 = sadd.s32 %s175, %s24
          %s179 = smul.addr %s178, 2
          %s180 = scalar_lea.hbm %s1, %s179
          %s182 = sshll.u32 %s180, 4
          %s183 = int_to_ptr.hbm [resolvable:$true] %s182
          %s184 = sshll.u32 %s174, 4
          %s185 = int_to_ptr.vmem [resolvable:$true] %s184
          %187 = dma.hbm_to_vmem [thread:$0]  %s183, 32, %s185, %s171
        $region24: #{tpu_custom_call.1} parent=15 // pred_fallthru
          _
      $region16: #{tpu_custom_call.1} parent=5 // pred_fallthru
        _
      %p188 = scmp.le.s32.totalorder 1, %s17
      %p189 = scmp.lt.s32.totalorder %s17, 3
      %p190 = pnand %p188, %p189
      %p191 = pneg %p190
      // Predicated region
      $region25: #{tpu_custom_call.1} parent=5 // pred_check
        _
      $region26: #{tpu_custom_call.1} parent=5 // pred_check_branch
        %193 = sbr.rel (%p190) target = $region28
      $region27: #{tpu_custom_call.1} parent=5 // pred_region
        %s194 = ssub.s32 %s17, 1
        %s195 = sand.u32 %s53, 1
        %s196 = scalar_lea.sflag [#allocation3], %s195
        %s197 = sand.u32 %s53, 1
        %s198 = smul.addr %s197, 8
        %s199 = scalar_lea.vmem [#allocation2], %s198
        // Predicated region
        $region29: #{tpu_custom_call.1} parent=27 // pred_check
          %p200 = pneg %p66
        $region30: #{tpu_custom_call.1} parent=27 // pred_check_branch
          %202 = sbr.rel (%p200) target = $region32
        $region31: #{tpu_custom_call.1} parent=27 // pred_region
          %204 = dma.done %s196, 128
        $region32: #{tpu_custom_call.1} parent=27 // pred_fallthru
          _
        %s205 = sand.u32 %s83, 1
        %s206 = scalar_lea.sflag [#allocation6], %s205
        %s207 = sand.u32 %s83, 1
        %s208 = smul.addr %s207, 2
        %s209 = scalar_lea.vmem [#allocation5], %s208
        // Predicated region
        $region33: #{tpu_custom_call.1} parent=27 // pred_check
          %p210 = pneg %p96
        $region34: #{tpu_custom_call.1} parent=27 // pred_check_branch
          %212 = sbr.rel (%p210) target = $region36
        $region35: #{tpu_custom_call.1} parent=27 // pred_region
          %214 = dma.done %s206, 32
        $region36: #{tpu_custom_call.1} parent=27 // pred_fallthru
          _
        %s215 = sand.u32 %s53, 1
        %s216 = scalar_lea.sflag [#allocation3], %s215
        %s217 = sand.u32 %s53, 1
        %s218 = smul.addr %s217, 8
        %s219 = scalar_lea.vmem [#allocation2], %s218
        %p220 = pneg %p66
        %p221 = pneg %p63
        %s222 = sand.u32 %s83, 1
        %s223 = scalar_lea.sflag [#allocation6], %s222
        %s224 = sand.u32 %s83, 1
        %s225 = smul.addr %s224, 2
        %s226 = scalar_lea.vmem [#allocation5], %s225
        %p227 = pneg %p96
        %p228 = pneg %p93
        %p229 = pneg %p124
        %p230 = pneg %p121
        %s231 = sand.u32 %s111, 1
        %s232 = scalar_lea.sflag [#allocation4], %s231
        %s233 = sand.u32 %s111, 1
        %s234 = smul.addr %s233, 8
        %s235 = scalar_lea.vmem [#allocation7], %s234
        %s236 = sadd.s32 %s28, %s29
        %s237 = sadd.s32 %s28, %s29
        %p238 = scmp.eq.s32.totalorder %s29, 0
        // Predicated region
        $region37: #{tpu_custom_call.1} parent=27 // pred_check
          %p239 = pneg %p238
        $region38: #{tpu_custom_call.1} parent=27 // pred_check_branch
          %241 = sbr.rel (%p239) target = $region40
        $region39: #{tpu_custom_call.1} parent=27 // pred_region
          %242 = vst [vmem:[%s235] sm:$0xff] 0.0
        $region40: #{tpu_custom_call.1} parent=27 // pred_fallthru
          _
        %v243 = vld [vmem:[%s199] sm:$0x3]
        %v244 = vld [vmem:[%s199 + $0x2] sm:$0x3]
        %v245 = vld [vmem:[%s199 + $0x4] sm:$0x3]
        %v246 = vld [vmem:[%s199 + $0x6] sm:$0x3]
        %v247 = vld [vmem:[%s209] sm:$0x3]
        %vm248 = vcmp.eq.s32.totalorder %v247, 0
        %vm249 = vcmp.eq.s32.totalorder %v247, 1
        %vm250 = vcmp.eq.s32.totalorder %v247, 2
        %vm251 = vcmp.eq.s32.totalorder %v247, 3
        %v252 = vand.u32 2147483647, %v243
        %v253 = vand.u32 2147483647, %v244
        %v254 = vand.u32 2147483647, %v245
        %v255 = vand.u32 2147483647, %v246
        %v256 = vsub.f32 0.0, %v252
        %v257 = vsub.f32 0.0, %v253
        %v258 = vsub.f32 0.0, %v254
        %v259 = vsub.f32 0.0, %v255
        %v260 = vmul.f32 %v256, 1.442695
        %v261 = vpow.pop %v260
        %v262 = vmul.f32 %v257, 1.442695
        %v263 = vpow.pop %v262
        %v264 = vmul.f32 %v258, 1.442695
        %v265 = vpow.pop %v264
        %v266 = vmul.f32 %v259, 1.442695
        %v267 = vpow.pop %v266
        %v268 = vadd.f32 %v261, 1.0
        %v269 = vadd.f32 %v263, 1.0
        %v270 = vadd.f32 %v265, 1.0
        %v271 = vadd.f32 %v267, 1.0
        %v272 = vrcp.pop %v268
        %v273 = vrcp.pop %v269
        %v274 = vrcp.pop %v270
        %v275 = vrcp.pop %v271
        %vm276 = vcmp.ge.f32.partialorder %v243, 0.0
        %vm277 = vcmp.ge.f32.partialorder %v244, 0.0
        %vm278 = vcmp.ge.f32.partialorder %v245, 0.0
        %vm279 = vcmp.ge.f32.partialorder %v246, 0.0
        %v280 = vmul.f32 %v261, %v272
        %v281 = vmul.f32 %v263, %v273
        %v282 = vmul.f32 %v265, %v274
        %v283 = vmul.f32 %v267, %v275
        %v284 = vsel %vm276, %v272, %v280
        %v285 = vsel %vm277, %v273, %v281
        %v286 = vsel %vm278, %v274, %v282
        %v287 = vsel %vm279, %v275, %v283
        %v288 = vadd.f32 %v261, 1.0
        %v289 = vlog2.pop %v288
        %v290 = vmul.f32 %v289, 0.6931472
        %v291 = vmul.f32 -0.5, %v261
        %v292 = vadd.f32 %v291, 1.0
        %v293 = vmul.f32 %v292, %v261
        %v294 = vand.u32 2147483647, %v261
        %vm295 = vcmp.lt.f32.partialorder %v294, 0.0004427343
        %v296 = vsel %vm295, %v293, %v290
        %v297 = vadd.f32 %v263, 1.0
        %v298 = vlog2.pop %v297
        %v299 = vmul.f32 %v298, 0.6931472
        %v300 = vmul.f32 -0.5, %v263
        %v301 = vadd.f32 %v300, 1.0
        %v302 = vmul.f32 %v301, %v263
        %v303 = vand.u32 2147483647, %v263
        %vm304 = vcmp.lt.f32.partialorder %v303, 0.0004427343
        %v305 = vsel %vm304, %v302, %v299
        %v306 = vadd.f32 %v265, 1.0
        %v307 = vlog2.pop %v306
        %v308 = vmul.f32 %v307, 0.6931472
        %v309 = vmul.f32 -0.5, %v265
        %v310 = vadd.f32 %v309, 1.0
        %v311 = vmul.f32 %v310, %v265
        %v312 = vand.u32 2147483647, %v265
        %vm313 = vcmp.lt.f32.partialorder %v312, 0.0004427343
        %v314 = vsel %vm313, %v311, %v308
        %v315 = vadd.f32 %v267, 1.0
        %v316 = vlog2.pop %v315
        %v317 = vmul.f32 %v316, 0.6931472
        %v318 = vmul.f32 -0.5, %v267
        %v319 = vadd.f32 %v318, 1.0
        %v320 = vmul.f32 %v319, %v267
        %v321 = vand.u32 2147483647, %v267
        %vm322 = vcmp.lt.f32.partialorder %v321, 0.0004427343
        %v323 = vsel %vm322, %v320, %v317
        %v324 = vsub.f32 1.0, %v284
        %v325 = vsub.f32 1.0, %v285
        %v326 = vsub.f32 1.0, %v286
        %v327 = vsub.f32 1.0, %v287
        %v328 = vsel %vm248, %v324, %v284
        %v329 = vsel %vm249, %v325, %v285
        %v330 = vsel %vm250, %v326, %v286
        %v331 = vsel %vm251, %v327, %v287
        %v332 = vmul.f32 %v328, %v328
        %v333 = vmul.f32 %v329, %v329
        %v334 = vmul.f32 %v330, %v330
        %v335 = vmul.f32 %v331, %v331
        %v336 = vsel %vm248, 0.25, 0.75
        %v337 = vsel %vm249, 0.25, 0.75
        %v338 = vsel %vm250, 0.25, 0.75
        %v339 = vsel %vm251, 0.25, 0.75
        %v340 = vmul.f32 %v336, %v332
        %v341 = vmul.f32 %v337, %v333
        %v342 = vmul.f32 %v338, %v334
        %v343 = vmul.f32 %v339, %v335
        %v344 = vsub.f32 0.0, %v243
        %v345 = vsub.f32 0.0, %v244
        %v346 = vsub.f32 0.0, %v245
        %v347 = vsub.f32 0.0, %v246
        %v348 = vmax.f32 %v344, 0.0
        %v349 = vmax.f32 %v345, 0.0
        %v350 = vmax.f32 %v346, 0.0
        %v351 = vmax.f32 %v347, 0.0
        %v352 = vmax.f32 %v243, 0.0
        %v353 = vmax.f32 %v244, 0.0
        %v354 = vmax.f32 %v245, 0.0
        %v355 = vmax.f32 %v246, 0.0
        %v356 = vsel %vm248, %v348, %v352
        %v357 = vsel %vm249, %v349, %v353
        %v358 = vsel %vm250, %v350, %v354
        %v359 = vsel %vm251, %v351, %v355
        %v360 = vadd.f32 %v356, %v296
        %v361 = vadd.f32 %v357, %v305
        %v362 = vadd.f32 %v358, %v314
        %v363 = vadd.f32 %v359, %v323
        %v364 = vmul.f32 %v340, %v360
        %v365 = vmul.f32 %v341, %v361
        %v366 = vmul.f32 %v342, %v362
        %v367 = vmul.f32 %v343, %v363
        %vm368 = vcmask 1041408
        %v369 = vsel %vm368, %v364, 0.0
        %v370 = vsel %vm368, %v365, 0.0
        %v371 = vadd.f32 %v369, %v370
        %v372 = vsel %vm368, %v366, 0.0
        %v373 = vadd.f32 %v371, %v372
        %v374 = vsel %vm368, %v367, 0.0
        %v375 = vadd.f32 %v373, %v374
        %v376 = vld [vmem:[%s235] sm:$0x3]
        %v377 = vadd.f32 %v376, %v375
        %378 = vst [vmem:[%s235] sm:$0x3] %v377
        %s379 = sand.u32 %s111, 1
        %s380 = scalar_lea.sflag [#allocation4], %s379
        %s381 = sand.u32 %s111, 1
        %s382 = smul.addr %s381, 8
        %s383 = scalar_lea.vmem [#allocation7], %s382
        // Predicated region
        $region41: #{tpu_custom_call.1} parent=27 // pred_check
          %p384 = pneg %p121
        $region42: #{tpu_custom_call.1} parent=27 // pred_check_branch
          %386 = sbr.rel (%p384) target = $region44
        $region43: #{tpu_custom_call.1} parent=27 // pred_region
          %388 = vsyncadd %s380, 0
          %s389 = sadd.s32 %s28, %s27
          %s390 = smul.addr %s389, 8
          %s391 = scalar_lea.hbm %s2, %s390
          %s393 = sshll.u32 %s383, 4
          %s394 = int_to_ptr.vmem [resolvable:$true] %s393
          %s395 = sshll.u32 %s391, 4
          %s396 = int_to_ptr.hbm [resolvable:$true] %s395
          %398 = dma.vmem_to_hbm [thread:$0]  %s394, 128, %s396, %s380
        $region44: #{tpu_custom_call.1} parent=27 // pred_fallthru
          _
      $region28: #{tpu_custom_call.1} parent=5 // pred_fallthru
        _
      %p399 = scmp.le.s32.totalorder 2, %s17
      // Predicated region
      $region45: #{tpu_custom_call.1} parent=5 // pred_check
        %p400 = pneg %p399
      $region46: #{tpu_custom_call.1} parent=5 // pred_check_branch
        %402 = sbr.rel (%p400) target = $region48
      $region47: #{tpu_custom_call.1} parent=5 // pred_region
        %s403 = ssub.s32 %s17, 2
        // Predicated region
        $region49: #{tpu_custom_call.1} parent=47 // pred_check
          %p404 = pneg %p127
        $region50: #{tpu_custom_call.1} parent=47 // pred_check_branch
          %406 = sbr.rel (%p404) target = $region52
        $region51: #{tpu_custom_call.1} parent=47 // pred_region
          %s407 = sand.u32 %s112, 1
          %s408 = scalar_lea.sflag [#allocation4], %s407
          %s409 = sand.u32 %s112, 1
          %s410 = smul.addr %s409, 8
          %s411 = scalar_lea.vmem [#allocation7], %s410
          %413 = dma.done %s408, 128
        $region52: #{tpu_custom_call.1} parent=47 // pred_fallthru
          _
      $region48: #{tpu_custom_call.1} parent=5 // pred_fallthru
        _
    $region6: #{tpu_custom_call.1} parent=1 // loop_footer
      %s21 = sadd.s32 1, %s17
    $region7: #{tpu_custom_call.1} parent=1 // loop_footer_branch
      %16 = sbr.rel target = $region3
    $region8: #{tpu_custom_call.1} parent=1 // loop_exit
      _
    %414 = vsyncpa [#allocation3], 1
    %s415 = scalar_lea.sflag [#allocation3], 1
    %416 = vsyncpa %s415, 1
    %417 = vsyncpa [#allocation6], 1
    %s418 = scalar_lea.sflag [#allocation6], 1
    %419 = vsyncpa %s418, 1
    %420 = vsyncpa [#allocation4], 1
    %s421 = scalar_lea.sflag [#allocation4], 1
    %422 = vsyncpa %s421, 1

</llo_original>
